<compile_context>
chip_gen: v5e
topology: v5e:2x2
jax: 0.10.0
libtpu: 0.0.40
codegen_flags: <defaults>
</compile_context>

<pallas_src>
import functools

import jax
import jax.numpy as jnp
from jax.experimental import pallas as pl
from jax.experimental.pallas import tpu as pltpu


def _sa_kernel(x_ref, p_ref, o_ref, *, eps, inv_s, rows):
    """One grid step: both shuffle halves of a `rows`-channel block.

    x_ref : (2, rows, S)  input slab (half-0 rows, half-1 rows)
    p_ref : (2*rows, 3)   folded per-channel constants [alpha, beta, gamma]
    o_ref : (rows, 2*S)   output block; lanes [0,S) = half 0, [S,2S) = half 1
    gate = sigmoid(A*x + B),  A = alpha*rstd,  B = beta + (gamma - A)*mean
    """
    p = p_ref[...].astype(jnp.float32)                 # (2*rows, 3)

    def gated(x, prm):                                 # x: (rows, S) f32, prm: (rows, 3)
        alpha = prm[:, 0:1]
        beta = prm[:, 1:2]
        gamma = prm[:, 2:3]
        mean = jnp.sum(x, axis=-1, keepdims=True) * inv_s
        ex2 = jnp.sum(x * x, axis=-1, keepdims=True) * inv_s
        var = jnp.maximum(ex2 - mean * mean, 0.0)      # one-pass variance, f32 accum
        a = alpha * jax.lax.rsqrt(var + eps)
        bias = beta + (gamma - a) * mean
        z = a * x + bias
        gate = 0.5 * jnp.tanh(0.5 * z) + 0.5           # == sigmoid(z), single EUP op
        return x * gate

    y0 = gated(x_ref[0].astype(jnp.float32), p[:rows])
    y1 = gated(x_ref[1].astype(jnp.float32), p[rows:])
    o_ref[...] = jnp.concatenate([y0, y1], axis=-1).astype(o_ref.dtype)


def _vmem_capacity_bytes():
    """Per-core VMEM capacity; conservative 64 MiB (v7x) fallback."""
    try:
        info = pltpu.get_tpu_info()
        for name in ("vmem_capacity_bytes", "vmem_size_bytes", "vmem_bytes"):
            v = getattr(info, name, None)
            if v:
                return int(v)
    except Exception:
        pass
    return 64 << 20


def _pick_nq(groups, c2, s, itemsize, batch, target_bytes, sublane):
    """Choose nq (k-groups per step). Per step we load BOTH halves: 2*nq*c2*S elems.

    Preference order: fits the byte budget > sublane-aligned row count (dtype-aware)
    > leaves >= 2 grid steps (so a 2-TensorCore chip gets sharded work) > largest.
    """
    divisors = [q for q in range(1, groups + 1) if groups % q == 0]
    fits = [q for q in divisors if 2 * q * c2 * s * itemsize <= target_bytes]
    if not fits:
        # Single (c2, S) slab per half no longer fits the target; caller raises the
        # VMEM limit and proceeds.
        # TODO(synk): for extreme spatial extents add an S-tiling pass (sum/sumsq
        # accumulation on an 'arbitrary' grid axis, then a normalize pass).
        return 1
    aligned = [q for q in fits if (q * c2) % sublane == 0]
    pool = aligned if aligned else fits
    multi = [q for q in pool if batch * (groups // q) >= 2]
    return max(multi) if multi else max(pool)


def sa_layer_forward(x, params, groups, eps=1e-5):
    """Shuffle-attention forward. x: (B, C, D, H, W) (NCDHW).

    params: (c2, 6) columns = [cweight, cbias, sweight, sbias, gn_weight, gn_bias].
    """
    b, c, d, h, w = x.shape
    assert c % (2 * groups) == 0
    c2 = c // (2 * groups)
    s = d * h * w
    half = c // 2                                   # = groups * c2

    # Free reshape: (B, C, D, H, W) -> (B, 2, C/2, S).  Channel order is preserved;
    # dim 1 is the shuffle half (ch < C/2 vs ch >= C/2).
    x4 = x.reshape(b, 2, half, s)

    # Fold all per-channel affine parameters into branch-free constants.
    # For original channel ch: k = ch // c2, j = ch % c2; spatial branch iff k is odd.
    cw, cb, sw, sb, gw, gb = (params[:, i].astype(jnp.float32) for i in range(6))
    is_spatial = (jnp.arange(2 * groups) % 2 == 1)[:, None]              # (2G, 1)
    alpha = jnp.where(is_spatial, (sw * gw)[None, :], 0.0)               # (2G, c2)
    beta = jnp.where(is_spatial, (sb + sw * gb)[None, :], cb[None, :])   # (2G, c2)
    gamma = jnp.where(is_spatial, 0.0, cw[None, :])                      # (2G, c2)
    abg = jnp.stack([p.reshape(c) for p in (alpha, beta, gamma)], axis=-1)  # (C, 3)

    itemsize = jnp.dtype(x.dtype).itemsize
    sublane = max(8, 32 // itemsize)                # 8 (f32) / 16 (bf16) / 32 (int8)

    vmem_cap = _vmem_capacity_bytes()
    target_bytes = min(16 << 20, vmem_cap // 8)     # combined (both-halves) input/step

    nq = _pick_nq(groups, c2, s, itemsize, b, target_bytes, sublane)
    nqb = groups // nq                              # grid steps along the channel axis
    rows = nq * c2                                  # channels per half per grid step

    # One packed constants array per grid step: rows of half 0 then rows of half 1.
    prm = jnp.concatenate(
        [abg[:half].reshape(nqb, rows, 3), abg[half:].reshape(nqb, rows, 3)], axis=1
    )                                               # (nqb, 2*rows, 3)

    in_specs = [
        pl.BlockSpec((None, 2, rows, s), lambda bi, qi: (bi, 0, qi, 0)),
        pl.BlockSpec((None, 2 * rows, 3), lambda bi, qi: (qi, 0, 0)),
    ]
    # Fused concat + channel_shuffle(2): output (B, C/2, 2*S); row r, lane-half t
    # holds processed source channel t*(C/2) + r, so reshape to (B, C, S) gives
    # channel 2*r + t, which is exactly the shuffled result.
    out_shape = jax.ShapeDtypeStruct((b, half, 2 * s), x.dtype)
    out_spec = pl.BlockSpec((None, rows, 2 * s), lambda bi, qi: (bi, qi, 0))

    # VMEM budget: double-buffered in/out blocks + in-kernel f32 temporaries + params,
    # with headroom; never request more than 75% of physical per-core VMEM.
    step_in = 2 * rows * s * itemsize
    step_out = 2 * rows * s * itemsize
    f32_tmp = 8 * rows * s * 4
    prm_bytes = 2 * (2 * rows) * 128 * 4
    need = 2 * (step_in + step_out) + f32_tmp + prm_bytes
    vmem_limit = int(min(int(0.75 * vmem_cap), max(int(1.5 * need), 16 << 20)))

    kernel = functools.partial(_sa_kernel, eps=float(eps), inv_s=1.0 / s, rows=rows)
    out = pl.pallas_call(
        kernel,
        out_shape=out_shape,
        grid_spec=pltpu.PrefetchScalarGridSpec(
            num_scalar_prefetch=0,
            grid=(b, nqb),
            in_specs=in_specs,
            out_specs=out_spec,
        ),
        compiler_params=pltpu.CompilerParams(
            dimension_semantics=("parallel", "parallel"),
            vmem_limit_bytes=vmem_limit,
        ),
    )(x4, prm)

    # Free reshape == concat + channel_shuffle(2) already applied.
    return out.reshape(b, c, d, h, w)


_sa_layer_jit = jax.jit(sa_layer_forward, static_argnames=("groups", "eps"))


def sa_layer_ref(x, params, groups, eps=1e-5):
    """Pure-JAX reference mirroring the PyTorch forward (for validation)."""
    b, c, d, h, w = x.shape
    c2 = c // (2 * groups)
    xr = x.reshape(b * groups, 2 * c2, d, h, w)
    x0, x1 = xr[:, :c2], xr[:, c2:]

    def pshape(col):
        return params[:, col].reshape(1, c2, 1, 1, 1)

    cw, cb, sw, sb, gw, gb = (pshape(i) for i in range(6))

    xn = jnp.mean(x0, axis=(2, 3, 4), keepdims=True)
    xn = cw * xn + cb
    xn = x0 * jax.nn.sigmoid(xn)

    m = jnp.mean(x1, axis=(2, 3, 4), keepdims=True)
    v = jnp.mean((x1 - m) ** 2, axis=(2, 3, 4), keepdims=True)
    xs = (x1 - m) / jnp.sqrt(v + eps) * gw + gb
    xs = sw * xs + sb
    xs = x1 * jax.nn.sigmoid(xs)

    out = jnp.concatenate([xn, xs], axis=1).reshape(b, c, d, h, w)
    out = (
        out.reshape(b, 2, c // 2, d, h, w)
        .transpose(0, 2, 1, 3, 4, 5)
        .reshape(b, c, d, h, w)
    )
    return out


def _run_case(key, b, c, d, h, w, groups):
    c2 = c // (2 * groups)
    k_x, k_p = jax.random.split(key)
    x = jax.random.normal(k_x, (b, c, d, h, w), dtype=jnp.float32)
    # deterministic params: [cweight, cbias, sweight, sbias, gn_weight, gn_bias]
    params = (jax.random.normal(k_p, (c2, 6), dtype=jnp.float32) * 0.5).astype(jnp.float32)

    out = jax.block_until_ready(_sa_layer_jit(x, params, groups=groups))
    ref = sa_layer_ref(x, params, groups)
    assert out.shape == (b, c, d, h, w)
    assert jnp.allclose(out, ref, atol=1e-4, rtol=1e-4), "mismatch vs reference"


if __name__ == "__main__":
    key = jax.random.PRNGKey(0)
    k1, k2 = jax.random.split(key)

    # primary case: b=2, c=32, groups=4, spatial 4x8x8 (S=256)
    _run_case(k1, b=2, c=32, d=4, h=8, w=8, groups=4)
    # secondary case: odd group count, b=1 (exercises the >=2-grid-step preference)
    _run_case(k2, b=1, c=48, d=2, h=8, w=8, groups=3)

    print("KERNEL_OK")
</pallas_src>

<mosaic_0001>
module attributes {stable_mosaic.version = 11 : i64} {
  func.func @_sa_kernel(%arg0: i32, %arg1: i32, %arg2: memref<1x2x16x256xf32, #tpu.memory_space<vmem>>, %arg3: memref<1x32x3xf32, #tpu.memory_space<vmem>>, %arg4: memref<1x16x512xf32, #tpu.memory_space<vmem>>) attributes {dimension_semantics = [#tpu.dimension_semantics<parallel>, #tpu.dimension_semantics<parallel>], iteration_bounds = array<i64: 2, 1>, scalar_prefetch = 0 : i64, scratch_operands = 0 : i64, tpu.core_type = #tpu.core_type<tc>, window_params = [{transform_indices = @transform_0, window_bounds = array<i64: 1, 2, 16, 256>}, {transform_indices = @transform_1, window_bounds = array<i64: 1, 32, 3>}, {transform_indices = @transform_2, window_bounds = array<i64: 1, 16, 512>}]} {
    %c0 = arith.constant 0 : index
    %c0_0 = arith.constant 0 : index
    %c0_1 = arith.constant 0 : index
    %0 = vector.load %arg3[%c0, %c0_0, %c0_1] : memref<1x32x3xf32, #tpu.memory_space<vmem>>, vector<1x32x3xf32>
    %1 = vector.shape_cast %0 : vector<1x32x3xf32> to vector<32x3xf32>
    %c0_2 = arith.constant 0 : index
    %c0_3 = arith.constant 0 : index
    %c0_4 = arith.constant 0 : index
    %c0_5 = arith.constant 0 : index
    %2 = vector.load %arg2[%c0_2, %c0_3, %c0_4, %c0_5] : memref<1x2x16x256xf32, #tpu.memory_space<vmem>>, vector<1x1x16x256xf32>
    %3 = vector.shape_cast %2 : vector<1x1x16x256xf32> to vector<16x256xf32>
    %4 = vector.extract_strided_slice %1 {offsets = [0, 0], sizes = [16, 3], strides = [1, 1]} : vector<32x3xf32> to vector<16x3xf32>
    %5 = vector.extract_strided_slice %4 {offsets = [0, 0], sizes = [16, 1], strides = [1, 1]} : vector<16x3xf32> to vector<16x1xf32>
    %6 = vector.extract_strided_slice %4 {offsets = [0, 1], sizes = [16, 1], strides = [1, 1]} : vector<16x3xf32> to vector<16x1xf32>
    %7 = vector.extract_strided_slice %4 {offsets = [0, 2], sizes = [16, 1], strides = [1, 1]} : vector<16x3xf32> to vector<16x1xf32>
    %cst = arith.constant dense<0.000000e+00> : vector<16xf32>
    %8 = vector.multi_reduction <add>, %3, %cst [1] : vector<16x256xf32> to vector<16xf32>
    %9 = vector.shape_cast %8 : vector<16xf32> to vector<16x1xf32>
    %cst_6 = arith.constant 3.906250e-03 : f32
    %10 = vector.broadcast %cst_6 : f32 to vector<16x1xf32>
    %11 = arith.mulf %9, %10 : vector<16x1xf32>
    %12 = arith.mulf %3, %3 : vector<16x256xf32>
    %cst_7 = arith.constant dense<0.000000e+00> : vector<16xf32>
    %13 = vector.multi_reduction <add>, %12, %cst_7 [1] : vector<16x256xf32> to vector<16xf32>
    %14 = vector.shape_cast %13 : vector<16xf32> to vector<16x1xf32>
    %cst_8 = arith.constant 3.906250e-03 : f32
    %15 = vector.broadcast %cst_8 : f32 to vector<16x1xf32>
    %16 = arith.mulf %14, %15 : vector<16x1xf32>
    %17 = arith.mulf %11, %11 : vector<16x1xf32>
    %18 = arith.subf %16, %17 : vector<16x1xf32>
    %cst_9 = arith.constant 0.000000e+00 : f32
    %19 = vector.broadcast %cst_9 : f32 to vector<16x1xf32>
    %20 = arith.maximumf %18, %19 : vector<16x1xf32>
    %cst_10 = arith.constant 9.99999974E-6 : f32
    %21 = vector.broadcast %cst_10 : f32 to vector<16x1xf32>
    %22 = arith.addf %20, %21 : vector<16x1xf32>
    %23 = math.rsqrt %22 : vector<16x1xf32>
    %24 = arith.mulf %5, %23 : vector<16x1xf32>
    %25 = arith.subf %7, %24 : vector<16x1xf32>
    %26 = arith.mulf %25, %11 : vector<16x1xf32>
    %27 = arith.addf %6, %26 : vector<16x1xf32>
    %28 = vector.broadcast %24 : vector<16x1xf32> to vector<16x256xf32>
    %29 = arith.mulf %28, %3 : vector<16x256xf32>
    %30 = vector.broadcast %27 : vector<16x1xf32> to vector<16x256xf32>
    %31 = arith.addf %29, %30 : vector<16x256xf32>
    %cst_11 = arith.constant 5.000000e-01 : f32
    %32 = vector.broadcast %cst_11 : f32 to vector<16x256xf32>
    %33 = arith.mulf %32, %31 : vector<16x256xf32>
    %34 = math.tanh %33 : vector<16x256xf32>
    %cst_12 = arith.constant 5.000000e-01 : f32
    %35 = vector.broadcast %cst_12 : f32 to vector<16x256xf32>
    %36 = arith.mulf %35, %34 : vector<16x256xf32>
    %cst_13 = arith.constant 5.000000e-01 : f32
    %37 = vector.broadcast %cst_13 : f32 to vector<16x256xf32>
    %38 = arith.addf %36, %37 : vector<16x256xf32>
    %39 = arith.mulf %3, %38 : vector<16x256xf32>
    %c0_14 = arith.constant 0 : index
    %c1 = arith.constant 1 : index
    %c0_15 = arith.constant 0 : index
    %c0_16 = arith.constant 0 : index
    %40 = vector.load %arg2[%c0_14, %c1, %c0_15, %c0_16] : memref<1x2x16x256xf32, #tpu.memory_space<vmem>>, vector<1x1x16x256xf32>
    %41 = vector.shape_cast %40 : vector<1x1x16x256xf32> to vector<16x256xf32>
    %42 = vector.extract_strided_slice %1 {offsets = [16, 0], sizes = [16, 3], strides = [1, 1]} : vector<32x3xf32> to vector<16x3xf32>
    %43 = vector.extract_strided_slice %42 {offsets = [0, 0], sizes = [16, 1], strides = [1, 1]} : vector<16x3xf32> to vector<16x1xf32>
    %44 = vector.extract_strided_slice %42 {offsets = [0, 1], sizes = [16, 1], strides = [1, 1]} : vector<16x3xf32> to vector<16x1xf32>
    %45 = vector.extract_strided_slice %42 {offsets = [0, 2], sizes = [16, 1], strides = [1, 1]} : vector<16x3xf32> to vector<16x1xf32>
    %cst_17 = arith.constant dense<0.000000e+00> : vector<16xf32>
    %46 = vector.multi_reduction <add>, %41, %cst_17 [1] : vector<16x256xf32> to vector<16xf32>
    %47 = vector.shape_cast %46 : vector<16xf32> to vector<16x1xf32>
    %cst_18 = arith.constant 3.906250e-03 : f32
    %48 = vector.broadcast %cst_18 : f32 to vector<16x1xf32>
    %49 = arith.mulf %47, %48 : vector<16x1xf32>
    %50 = arith.mulf %41, %41 : vector<16x256xf32>
    %cst_19 = arith.constant dense<0.000000e+00> : vector<16xf32>
    %51 = vector.multi_reduction <add>, %50, %cst_19 [1] : vector<16x256xf32> to vector<16xf32>
    %52 = vector.shape_cast %51 : vector<16xf32> to vector<16x1xf32>
    %cst_20 = arith.constant 3.906250e-03 : f32
    %53 = vector.broadcast %cst_20 : f32 to vector<16x1xf32>
    %54 = arith.mulf %52, %53 : vector<16x1xf32>
    %55 = arith.mulf %49, %49 : vector<16x1xf32>
    %56 = arith.subf %54, %55 : vector<16x1xf32>
    %cst_21 = arith.constant 0.000000e+00 : f32
    %57 = vector.broadcast %cst_21 : f32 to vector<16x1xf32>
    %58 = arith.maximumf %56, %57 : vector<16x1xf32>
    %cst_22 = arith.constant 9.99999974E-6 : f32
    %59 = vector.broadcast %cst_22 : f32 to vector<16x1xf32>
    %60 = arith.addf %58, %59 : vector<16x1xf32>
    %61 = math.rsqrt %60 : vector<16x1xf32>
    %62 = arith.mulf %43, %61 : vector<16x1xf32>
    %63 = arith.subf %45, %62 : vector<16x1xf32>
    %64 = arith.mulf %63, %49 : vector<16x1xf32>
    %65 = arith.addf %44, %64 : vector<16x1xf32>
    %66 = vector.broadcast %62 : vector<16x1xf32> to vector<16x256xf32>
    %67 = arith.mulf %66, %41 : vector<16x256xf32>
    %68 = vector.broadcast %65 : vector<16x1xf32> to vector<16x256xf32>
    %69 = arith.addf %67, %68 : vector<16x256xf32>
    %cst_23 = arith.constant 5.000000e-01 : f32
    %70 = vector.broadcast %cst_23 : f32 to vector<16x256xf32>
    %71 = arith.mulf %70, %69 : vector<16x256xf32>
    %72 = math.tanh %71 : vector<16x256xf32>
    %cst_24 = arith.constant 5.000000e-01 : f32
    %73 = vector.broadcast %cst_24 : f32 to vector<16x256xf32>
    %74 = arith.mulf %73, %72 : vector<16x256xf32>
    %cst_25 = arith.constant 5.000000e-01 : f32
    %75 = vector.broadcast %cst_25 : f32 to vector<16x256xf32>
    %76 = arith.addf %74, %75 : vector<16x256xf32>
    %77 = arith.mulf %41, %76 : vector<16x256xf32>
    %78 = tpu.concatenate %39, %77 in 1 : vector<16x256xf32>, vector<16x256xf32> -> vector<16x512xf32>
    %c0_26 = arith.constant 0 : index
    %c0_27 = arith.constant 0 : index
    %c0_28 = arith.constant 0 : index
    %79 = vector.load %arg4[%c0_26, %c0_27, %c0_28] : memref<1x16x512xf32, #tpu.memory_space<vmem>>, vector<1x16x512xf32>
    %80 = vector.shape_cast %79 : vector<1x16x512xf32> to vector<16x512xf32>
    %81 = vector.shape_cast %78 : vector<16x512xf32> to vector<1x16x512xf32>
    tpu.vector_store %arg4[%c0_26, %c0_27, %c0_28], %81 {strides = array<i32>} : memref<1x16x512xf32, #tpu.memory_space<vmem>>, vector<1x16x512xf32>,
    return
  }
  func.func @transform_0(%arg0: i32, %arg1: i32) -> (i32, i32, i32, i32) {
    %c0_i32 = arith.constant 0 : i32
    %c0_i32_0 = arith.constant 0 : i32
    %c0_i32_1 = arith.constant 0 : i32
    return %arg0, %c0_i32, %arg1, %c0_i32_0 : i32, i32, i32, i32
  }
  func.func @transform_1(%arg0: i32, %arg1: i32) -> (i32, i32, i32) {
    %c0_i32 = arith.constant 0 : i32
    %c0_i32_0 = arith.constant 0 : i32
    %c0_i32_1 = arith.constant 0 : i32
    return %arg1, %c0_i32, %c0_i32_0 : i32, i32, i32
  }
  func.func @transform_2(%arg0: i32, %arg1: i32) -> (i32, i32, i32) {
    %c0_i32 = arith.constant 0 : i32
    %c0_i32_0 = arith.constant 0 : i32
    return %arg0, %arg1, %c0_i32 : i32, i32, i32
  }
}

</mosaic_0001>

<llo_original>
// kernel: sa_layer_forward.1
$region0: #{sa_layer_forward.1}
  #allocation0 [shape = 'u32[]', space=smem, size = 0x4, offset = 0x4, fixed_abs, tag = 'smem constant byte address 0x4 - core index']
  #allocation1 [shape = 'u32[72,128]{1,0:T(1,128)}', space=vmem, size = 0x9000, scoped, tag = 'internal scratch']
  %s0 = inlined_call_operand.vmem [shape: f32[2,2,16,256], index: 0, kind: input, shape index: {}]
  %s1 = inlined_call_operand.vmem [shape: f32[1,32,3], index: 1, kind: input, shape index: {}]
  %s2 = inlined_call_operand.vmem [shape: f32[2,16,512], index: 2, kind: output, shape index: {}]
  %s3 = sld [smem:[#allocation0]]
  $region41: #{sa_layer_forward.1} parent=0
    _
  %s5 = ssub.s32 1, %s3
  %s6 = scalar_select 0, %s5, %s3
  loop: start=0, step=1, limit=4
  $region2: #{sa_layer_forward.1} parent=0 // loop_pre_header
    _
  $region3: #{sa_layer_forward.1} parent=0 // loop_header
    %s8 = sphi 0, %s12
    %p9 = scmp.ge.s32.totalorder %s8, 4
    %s15 = sphi 0, %s27
    %s16 = sphi 0, %s23
    %s17 = sphi 0, %s15
    %s18 = sphi 0, %s16
    %s19 = sphi 0, %s17
    %s20 = sphi 0, %s18
    %s32 = sphi 0, %s34
    %s35 = sphi 0, %s32
    %s36 = sphi 0, %s35
    %s52 = sphi 0, %s36
    %s58 = sphi 0, %s60
    %s61 = sphi 0, %s58
    %s62 = sphi 0, %s61
    %s78 = sphi 0, %s62
    %s86 = sphi 0, %s88
    %s89 = sphi 0, %s86
    %s90 = sphi 0, %s89
    %s106 = sphi 0, %s90
  $region4: #{sa_layer_forward.1} parent=0 // loop_header_branch
    %11 = sbr.rel (%p9) target = $region8
  $region5: #{sa_layer_forward.1} parent=0 // loop_body
    %s13 = ssub.s32 %s8, 1
    %s14 = ssub.s32 %s8, 2
    %s21 = sadd.s32 1, %s16
    %p22 = scmp.ge.s32.totalorder %s21, 1
    %s23 = scalar_select %p22, 0, %s21
    %s24 = sadd.s32 1, %s15
    %s25 = scalar_select %p22, %s24, %s15
    %p26 = scmp.ge.s32.totalorder %s25, 2
    %s27 = scalar_select %p26, 0, %s25
    %s28 = ssub.s32 %s15, %s27
    %s29 = ssub.s32 %s16, %s23
    %s30 = sor.u32 %s28, %s29
    %p31 = scmp.eq.s32.totalorder %s30, 0
    %s33 = sadd.s32 %s32, 1
    %s34 = scalar_select %p31, %s32, %s33
    %p37 = pneg %p31
    %p38 = scmp.eq.s32.totalorder %s8, 1
    %p39 = por %p37, %p38
    %p40 = scmp.ne.s32.totalorder %s32, %s35
    %p41 = scmp.eq.s32.totalorder %s8, 0
    %p42 = por %p40, %p41
    %p43 = scmp.ne.s32.totalorder %s32, %s35
    %p44 = scmp.eq.s32.totalorder %s13, 1
    %p45 = por %p43, %p44
    %p46 = scmp.ne.s32.totalorder %s35, %s36
    %p47 = scmp.eq.s32.totalorder %s13, 0
    %p48 = por %p46, %p47
    %p49 = scmp.ne.s32.totalorder %s35, %s36
    %p50 = scmp.eq.s32.totalorder %s14, 1
    %p51 = por %p49, %p50
    %p53 = scmp.ne.s32.totalorder %s36, %s52
    %p54 = scmp.eq.s32.totalorder %s14, 0
    %p55 = por %p53, %p54
    %s56 = ssub.s32 %s16, %s23
    %p57 = scmp.eq.s32.totalorder %s56, 0
    %s59 = sadd.s32 %s58, 1
    %s60 = scalar_select %p57, %s58, %s59
    %p63 = pneg %p57
    %p64 = scmp.eq.s32.totalorder %s8, 1
    %p65 = por %p63, %p64
    %p66 = scmp.ne.s32.totalorder %s58, %s61
    %p67 = scmp.eq.s32.totalorder %s8, 0
    %p68 = por %p66, %p67
    %p69 = scmp.ne.s32.totalorder %s58, %s61
    %p70 = scmp.eq.s32.totalorder %s13, 1
    %p71 = por %p69, %p70
    %p72 = scmp.ne.s32.totalorder %s61, %s62
    %p73 = scmp.eq.s32.totalorder %s13, 0
    %p74 = por %p72, %p73
    %p75 = scmp.ne.s32.totalorder %s61, %s62
    %p76 = scmp.eq.s32.totalorder %s14, 1
    %p77 = por %p75, %p76
    %p79 = scmp.ne.s32.totalorder %s62, %s78
    %p80 = scmp.eq.s32.totalorder %s14, 0
    %p81 = por %p79, %p80
    %s82 = ssub.s32 %s15, %s27
    %s83 = ssub.s32 %s16, %s23
    %s84 = sor.u32 %s82, %s83
    %p85 = scmp.eq.s32.totalorder %s84, 0
    %s87 = sadd.s32 %s86, 1
    %s88 = scalar_select %p85, %s86, %s87
    %p91 = pneg %p85
    %p92 = scmp.eq.s32.totalorder %s8, 1
    %p93 = por %p91, %p92
    %p94 = scmp.ne.s32.totalorder %s86, %s89
    %p95 = scmp.eq.s32.totalorder %s8, 0
    %p96 = por %p94, %p95
    %p97 = scmp.ne.s32.totalorder %s86, %s89
    %p98 = scmp.eq.s32.totalorder %s13, 1
    %p99 = por %p97, %p98
    %p100 = scmp.ne.s32.totalorder %s89, %s90
    %p101 = scmp.eq.s32.totalorder %s13, 0
    %p102 = por %p100, %p101
    %p103 = scmp.ne.s32.totalorder %s89, %s90
    %p104 = scmp.eq.s32.totalorder %s14, 1
    %p105 = por %p103, %p104
    %p107 = scmp.ne.s32.totalorder %s90, %s106
    %p108 = scmp.eq.s32.totalorder %s14, 0
    %p109 = por %p107, %p108
    %p110 = scmp.le.s32.totalorder 1, %s8
    %p111 = scmp.lt.s32.totalorder %s8, 3
    %p112 = pnand %p110, %p111
    %p113 = pneg %p112
    // Predicated region
    $region9: #{sa_layer_forward.1} parent=5 // pred_check
      _
    $region10: #{sa_layer_forward.1} parent=5 // pred_check_branch
      %115 = sbr.rel (%p112) target = $region12
    $region11: #{sa_layer_forward.1} parent=5 // pred_region
      %s116 = ssub.s32 %s8, 1
      // Predicated region
      $region13: #{sa_layer_forward.1} parent=11 // pred_check
        %p117 = pneg %p74
      $region14: #{sa_layer_forward.1} parent=11 // pred_check_branch
        %119 = sbr.rel (%p117) target = $region16
      $region15: #{sa_layer_forward.1} parent=11 // pred_region
        %p120 = scmp.lt.s32.totalorder %s18, 0
        %s121 = scalar_select %p120, %s18, 0
        %s122 = smul.addr %s121, 4
        %s123 = smul.addr %s122, 8
        %s124 = scalar_lea.vmem %s1, %s123
      $region16: #{sa_layer_forward.1} parent=11 // pred_fallthru
        _
    $region12: #{sa_layer_forward.1} parent=5 // pred_fallthru
      _
    %p125 = scmp.lt.s32.totalorder %s8, 2
    // Predicated region
    $region17: #{sa_layer_forward.1} parent=5 // pred_check
      %p126 = pneg %p125
    $region18: #{sa_layer_forward.1} parent=5 // pred_check_branch
      %128 = sbr.rel (%p126) target = $region20
    $region19: #{sa_layer_forward.1} parent=5 // pred_region
      // Predicated region
      $region21: #{sa_layer_forward.1} parent=19 // pred_check
        %p129 = pneg %p42
      $region22: #{sa_layer_forward.1} parent=19 // pred_check_branch
        %131 = sbr.rel (%p129) target = $region24
      $region23: #{sa_layer_forward.1} parent=19 // pred_region
        %s132 = smul.u32 2, %s16
        %p133 = scmp.lt.s32.totalorder %s15, 1
        %s134 = scalar_select %p133, %s15, 1
        %p135 = scmp.lt.s32.totalorder %s132, 1
        %s136 = scalar_select %p135, %s132, 1
        %s137 = smul.addr %s136, 2
        %s138 = smul.addr %s134, 8
        %s139 = sadd.s32 %s137, %s138
        %s140 = smul.addr %s139, 8
        %s141 = scalar_lea.vmem %s0, %s140
        %s142 = smul.u32 2, %s16
      $region24: #{sa_layer_forward.1} parent=19 // pred_fallthru
        _
    $region20: #{sa_layer_forward.1} parent=5 // pred_fallthru
      _
    %p143 = scmp.le.s32.totalorder 1, %s8
    %p144 = scmp.lt.s32.totalorder %s8, 3
    %p145 = pnand %p143, %p144
    %p146 = pneg %p145
    // Predicated region
    $region25: #{sa_layer_forward.1} parent=5 // pred_check
      _
    $region26: #{sa_layer_forward.1} parent=5 // pred_check_branch
      %148 = sbr.rel (%p145) target = $region28
    $region27: #{sa_layer_forward.1} parent=5 // pred_region
      %s149 = ssub.s32 %s8, 1
      %s150 = smul.u32 2, %s18
      %p151 = scmp.lt.s32.totalorder %s17, 1
      %s152 = scalar_select %p151, %s17, 1
      %p153 = scmp.lt.s32.totalorder %s150, 1
      %s154 = scalar_select %p153, %s150, 1
      %s155 = smul.addr %s154, 2
      %s156 = smul.addr %s152, 8
      %s157 = sadd.s32 %s155, %s156
      %s158 = smul.addr %s157, 8
      %s159 = scalar_lea.vmem %s0, %s158
      %p160 = pneg %p48
      %p161 = pneg %p45
      %p162 = scmp.lt.s32.totalorder %s18, 0
      %s163 = scalar_select %p162, %s18, 0
      %s164 = smul.addr %s163, 4
      %s165 = smul.addr %s164, 8
      %s166 = scalar_lea.vmem %s1, %s165
      %p167 = pneg %p74
      %p168 = pneg %p71
      %p169 = pneg %p102
      %p170 = pneg %p99
      %s171 = smul.u32 2, %s18
      %p172 = scmp.lt.s32.totalorder %s17, 1
      %s173 = scalar_select %p172, %s17, 1
      %p174 = scmp.lt.s32.totalorder %s171, 1
      %s175 = scalar_select %p174, %s171, 1
      %s176 = smul.addr %s175, 4
      %s177 = smul.addr %s173, 8
      %s178 = sadd.s32 %s176, %s177
      %s179 = smul.addr %s178, 8
      %s180 = scalar_lea.vmem %s2, %s179
      %s181 = smul.u32 2, %s18
      %p182 = scmp.lt.s32.totalorder %s17, 1
      %s183 = scalar_select %p182, %s17, 1
      %p184 = scmp.lt.s32.totalorder %s181, 1
      %s185 = scalar_select %p184, %s181, 1
      %s186 = smul.addr %s185, 2
      %s187 = smul.addr %s183, 8
      %s188 = sadd.s32 %s186, %s187
      %s189 = smul.addr %s188, 8
      %s190 = scalar_lea.vmem %s0, %s189
      %s191 = smul.u32 2, %s18
      %p192 = scmp.lt.s32.totalorder %s18, 0
      %s193 = scalar_select %p192, %s18, 0
      %s194 = smul.addr %s193, 4
      %s195 = smul.addr %s194, 8
      %s196 = scalar_lea.vmem %s1, %s195
      %s197 = smul.u32 2, %s18
      %p198 = scmp.lt.s32.totalorder %s17, 1
      %s199 = scalar_select %p198, %s17, 1
      %p200 = scmp.lt.s32.totalorder %s197, 1
      %s201 = scalar_select %p200, %s197, 1
      %s202 = smul.addr %s201, 4
      %s203 = smul.addr %s199, 8
      %s204 = sadd.s32 %s202, %s203
      %s205 = smul.addr %s204, 8
      %s206 = scalar_lea.vmem %s2, %s205
      %s207 = smul.u32 2, %s18
      %v208 = vld [vmem:[%s196] sm:$0xff]
      %v209 = vld [vmem:[%s196 + $0x8] sm:$0xff]
      %v210 = vld [vmem:[%s196 + $0x10] sm:$0xff]
      %v211 = vld [vmem:[%s196 + $0x18] sm:$0xff]
      %v212 = vld [vmem:[%s190] sm:$0xff]
      %v213 = vld [vmem:[%s190 + $0x8] sm:$0xff]
      %v214 = vld [vmem:[%s190 + $0x10] sm:$0xff]
      %v215 = vld [vmem:[%s190 + $0x18] sm:$0xff]
      %v216 = vadd.f32 %v212, %v213
      %217 = vadd.xlane.f32.xlu0 %v216
      %v218 = vpop.xlane.xlu0 %217
      %v219 = vadd.f32 %v214, %v215
      %220 = vadd.xlane.f32.xlu0 %v219
      %v221 = vpop.xlane.xlu0 %220
      %v222 = vmul.f32 %v218, 0.00390625
      %v223 = vmul.f32 %v221, 0.00390625
      %v224 = vmul.f32 %v212, %v212
      %v225 = vmul.f32 %v213, %v213
      %v226 = vmul.f32 %v214, %v214
      %v227 = vmul.f32 %v215, %v215
      %v228 = vadd.f32 %v224, %v225
      %229 = vadd.xlane.f32.xlu0 %v228
      %v230 = vpop.xlane.xlu0 %229
      %v231 = vadd.f32 %v226, %v227
      %232 = vadd.xlane.f32.xlu0 %v231
      %v233 = vpop.xlane.xlu0 %232
      %v234 = vmul.f32 %v230, 0.00390625
      %v235 = vmul.f32 %v233, 0.00390625
      %v236 = vmul.f32 %v222, %v222
      %v237 = vmul.f32 %v223, %v223
      %v238 = vsub.f32 %v234, %v236
      %v239 = vsub.f32 %v235, %v237
      %v240 = vmax.f32 %v238, 0.0
      %v241 = vmax.f32 %v239, 0.0
      %v242 = vadd.f32 %v240, 1e-05
      %v243 = vadd.f32 %v241, 1e-05
      %v244 = vrsqrt.pop %v242
      %v245 = vmul.f32 %v244, %v242
      %v246 = vmul.f32 %v245, %v244
      %v247 = vmul.f32 0.5, %v246
      %v248 = vsub.f32 1.5, %v247
      %v249 = vmul.f32 %v244, %v248
      %vm250 = vweird.f32 %v242
      %vm251 = vweird.f32 %v244
      %vm252 = vmor %vm250, %vm251
      %v253 = vsel %vm252, %v244, %v249
      %v254 = vrsqrt.pop %v243
      %v255 = vmul.f32 %v254, %v243
      %v256 = vmul.f32 %v255, %v254
      %v257 = vmul.f32 0.5, %v256
      %v258 = vsub.f32 1.5, %v257
      %v259 = vmul.f32 %v254, %v258
      %vm260 = vweird.f32 %v243
      %vm261 = vweird.f32 %v254
      %vm262 = vmor %vm260, %vm261
      %v263 = vsel %vm262, %v254, %v259
      %v264 = vmul.f32 %v208, %v253
      %v265 = vmul.f32 %v209, %v263
      %268 = vrot.lane.b32.xlu0 %v264, 2
      %v269 = vpop.permute.xlu0 %268
      %270 = vrot.lane.b32.xlu0 %v265, 2
      %v271 = vpop.permute.xlu0 %270
      %v274 = vsub.f32 %v208, %v269
      %v275 = vsub.f32 %v209, %v271
      %v276 = vmul.f32 %v274, %v222
      %v277 = vmul.f32 %v275, %v223
      %280 = vrot.lane.b32.xlu0 %v276, 127
      %v281 = vpop.permute.xlu0 %280
      %282 = vrot.lane.b32.xlu0 %v277, 127
      %v283 = vpop.permute.xlu0 %282
      %v286 = vadd.f32 %v208, %v281
      %v287 = vadd.f32 %v209, %v283
      %288 = vset.pattern.permute.xlu0 0
      %289 = vperm.xlu0 %288, %v264
      %v290 = vpop.permute.xlu0 %289
      %292 = vset.pattern.permute.xlu0 0
      %293 = vperm.xlu0 %292, %v265
      %v294 = vpop.permute.xlu0 %293
      %v296 = vmul.f32 %v290, %v212
      %v297 = vmul.f32 %v290, %v213
      %v298 = vmul.f32 %v294, %v214
      %v299 = vmul.f32 %v294, %v215
      %301 = vset.pattern.permute.xlu0 1
      %302 = vperm.xlu0 %301, %v286
      %v303 = vpop.permute.xlu0 %302
      %306 = vset.pattern.permute.xlu0 1
      %307 = vperm.xlu0 %306, %v287
      %v308 = vpop.permute.xlu0 %307
      %v310 = vadd.f32 %v296, %v303
      %v311 = vadd.f32 %v297, %v303
      %v312 = vadd.f32 %v298, %v308
      %v313 = vadd.f32 %v299, %v308
      %v314 = vmul.f32 %v310, 0.5
      %v315 = vmul.f32 %v311, 0.5
      %v316 = vmul.f32 %v312, 0.5
      %v317 = vmul.f32 %v313, 0.5
      %v318 = vtanh.pop %v314
      %v319 = vtanh.pop %v315
      %v320 = vtanh.pop %v316
      %v321 = vtanh.pop %v317
      %v322 = vmul.f32 %v318, 0.5
      %v323 = vmul.f32 %v319, 0.5
      %v324 = vmul.f32 %v320, 0.5
      %v325 = vmul.f32 %v321, 0.5
      %v326 = vadd.f32 %v322, 0.5
      %v327 = vadd.f32 %v323, 0.5
      %v328 = vadd.f32 %v324, 0.5
      %v329 = vadd.f32 %v325, 0.5
      %v330 = vmul.f32 %v212, %v326
      %v331 = vmul.f32 %v213, %v327
      %v332 = vmul.f32 %v214, %v328
      %v333 = vmul.f32 %v215, %v329
      %s334 = scalar_lea.vmem %s190, 32
      %v335 = vld [vmem:[%s334] sm:$0xff]
      %v336 = vld [vmem:[%s334 + $0x8] sm:$0xff]
      %v337 = vld [vmem:[%s334 + $0x10] sm:$0xff]
      %v338 = vld [vmem:[%s334 + $0x18] sm:$0xff]
      %v339 = vadd.f32 %v335, %v336
      %340 = vadd.xlane.f32.xlu0 %v339
      %v341 = vpop.xlane.xlu0 %340
      %v342 = vadd.f32 %v337, %v338
      %343 = vadd.xlane.f32.xlu0 %v342
      %v344 = vpop.xlane.xlu0 %343
      %v345 = vmul.f32 %v341, 0.00390625
      %v346 = vmul.f32 %v344, 0.00390625
      %v347 = vmul.f32 %v335, %v335
      %v348 = vmul.f32 %v336, %v336
      %v349 = vmul.f32 %v337, %v337
      %v350 = vmul.f32 %v338, %v338
      %v351 = vadd.f32 %v347, %v348
      %352 = vadd.xlane.f32.xlu0 %v351
      %v353 = vpop.xlane.xlu0 %352
      %v354 = vadd.f32 %v349, %v350
      %355 = vadd.xlane.f32.xlu0 %v354
      %v356 = vpop.xlane.xlu0 %355
      %v357 = vmul.f32 %v353, 0.00390625
      %v358 = vmul.f32 %v356, 0.00390625
      %v359 = vmul.f32 %v345, %v345
      %v360 = vmul.f32 %v346, %v346
      %v361 = vsub.f32 %v357, %v359
      %v362 = vsub.f32 %v358, %v360
      %v363 = vmax.f32 %v361, 0.0
      %v364 = vmax.f32 %v362, 0.0
      %v365 = vadd.f32 %v363, 1e-05
      %v366 = vadd.f32 %v364, 1e-05
      %v367 = vrsqrt.pop %v365
      %v368 = vmul.f32 %v367, %v365
      %v369 = vmul.f32 %v368, %v367
      %v370 = vmul.f32 0.5, %v369
      %v371 = vsub.f32 1.5, %v370
      %v372 = vmul.f32 %v367, %v371
      %vm373 = vweird.f32 %v365
      %vm374 = vweird.f32 %v367
      %vm375 = vmor %vm373, %vm374
      %v376 = vsel %vm375, %v367, %v372
      %v377 = vrsqrt.pop %v366
      %v378 = vmul.f32 %v377, %v366
      %v379 = vmul.f32 %v378, %v377
      %v380 = vmul.f32 0.5, %v379
      %v381 = vsub.f32 1.5, %v380
      %v382 = vmul.f32 %v377, %v381
      %vm383 = vweird.f32 %v366
      %vm384 = vweird.f32 %v377
      %vm385 = vmor %vm383, %vm384
      %v386 = vsel %vm385, %v377, %v382
      %v387 = vmul.f32 %v210, %v376
      %v388 = vmul.f32 %v211, %v386
      %391 = vrot.lane.b32.xlu0 %v387, 2
      %v392 = vpop.permute.xlu0 %391
      %393 = vrot.lane.b32.xlu0 %v388, 2
      %v394 = vpop.permute.xlu0 %393
      %v397 = vsub.f32 %v210, %v392
      %v398 = vsub.f32 %v211, %v394
      %v399 = vmul.f32 %v397, %v345
      %v400 = vmul.f32 %v398, %v346
      %403 = vrot.lane.b32.xlu0 %v399, 127
      %v404 = vpop.permute.xlu0 %403
      %405 = vrot.lane.b32.xlu0 %v400, 127
      %v406 = vpop.permute.xlu0 %405
      %v409 = vadd.f32 %v210, %v404
      %v410 = vadd.f32 %v211, %v406
      %411 = vset.pattern.permute.xlu0 0
      %412 = vperm.xlu0 %411, %v387
      %v413 = vpop.permute.xlu0 %412
      %415 = vset.pattern.permute.xlu0 0
      %416 = vperm.xlu0 %415, %v388
      %v417 = vpop.permute.xlu0 %416
      %v419 = vmul.f32 %v413, %v335
      %v420 = vmul.f32 %v413, %v336
      %v421 = vmul.f32 %v417, %v337
      %v422 = vmul.f32 %v417, %v338
      %424 = vset.pattern.permute.xlu0 1
      %425 = vperm.xlu0 %424, %v409
      %v426 = vpop.permute.xlu0 %425
      %429 = vset.pattern.permute.xlu0 1
      %430 = vperm.xlu0 %429, %v410
      %v431 = vpop.permute.xlu0 %430
      %v433 = vadd.f32 %v419, %v426
      %v434 = vadd.f32 %v420, %v426
      %v435 = vadd.f32 %v421, %v431
      %v436 = vadd.f32 %v422, %v431
      %v437 = vmul.f32 %v433, 0.5
      %v438 = vmul.f32 %v434, 0.5
      %v439 = vmul.f32 %v435, 0.5
      %v440 = vmul.f32 %v436, 0.5
      %v441 = vtanh.pop %v437
      %v442 = vtanh.pop %v438
      %v443 = vtanh.pop %v439
      %v444 = vtanh.pop %v440
      %v445 = vmul.f32 %v441, 0.5
      %v446 = vmul.f32 %v442, 0.5
      %v447 = vmul.f32 %v443, 0.5
      %v448 = vmul.f32 %v444, 0.5
      %v449 = vadd.f32 %v445, 0.5
      %v450 = vadd.f32 %v446, 0.5
      %v451 = vadd.f32 %v447, 0.5
      %v452 = vadd.f32 %v448, 0.5
      %v453 = vmul.f32 %v335, %v449
      %v454 = vmul.f32 %v336, %v450
      %v455 = vmul.f32 %v337, %v451
      %v456 = vmul.f32 %v338, %v452
      %457 = vst [vmem:[%s206] sm:$0xff] %v330
      %458 = vst [vmem:[%s206 + $0x8] sm:$0xff] %v331
      %459 = vst [vmem:[%s206 + $0x10] sm:$0xff] %v453
      %460 = vst [vmem:[%s206 + $0x18] sm:$0xff] %v454
      %461 = vst [vmem:[%s206 + $0x20] sm:$0xff] %v332
      %462 = vst [vmem:[%s206 + $0x28] sm:$0xff] %v333
      %463 = vst [vmem:[%s206 + $0x30] sm:$0xff] %v455
      %464 = vst [vmem:[%s206 + $0x38] sm:$0xff] %v456
      %s465 = smul.u32 2, %s18
      %p466 = scmp.lt.s32.totalorder %s17, 1
      %s467 = scalar_select %p466, %s17, 1
      %p468 = scmp.lt.s32.totalorder %s465, 1
      %s469 = scalar_select %p468, %s465, 1
      %s470 = smul.addr %s469, 4
      %s471 = smul.addr %s467, 8
      %s472 = sadd.s32 %s470, %s471
      %s473 = smul.addr %s472, 8
      %s474 = scalar_lea.vmem %s2, %s473
      // Predicated region
      $region29: #{sa_layer_forward.1} parent=27 // pred_check
        %p475 = pneg %p99
      $region30: #{sa_layer_forward.1} parent=27 // pred_check_branch
        %477 = sbr.rel (%p475) target = $region32
      $region31: #{sa_layer_forward.1} parent=27 // pred_region
        %s478 = smul.u32 2, %s18
      $region32: #{sa_layer_forward.1} parent=27 // pred_fallthru
        _
    $region28: #{sa_layer_forward.1} parent=5 // pred_fallthru
      _
    %p479 = scmp.le.s32.totalorder 2, %s8
    // Predicated region
    $region33: #{sa_layer_forward.1} parent=5 // pred_check
      %p480 = pneg %p479
    $region34: #{sa_layer_forward.1} parent=5 // pred_check_branch
      %482 = sbr.rel (%p480) target = $region36
    $region35: #{sa_layer_forward.1} parent=5 // pred_region
      %s483 = ssub.s32 %s8, 2
      // Predicated region
      $region37: #{sa_layer_forward.1} parent=35 // pred_check
        %p484 = pneg %p105
      $region38: #{sa_layer_forward.1} parent=35 // pred_check_branch
        %486 = sbr.rel (%p484) target = $region40
      $region39: #{sa_layer_forward.1} parent=35 // pred_region
        %s487 = smul.u32 2, %s20
        %p488 = scmp.lt.s32.totalorder %s19, 1
        %s489 = scalar_select %p488, %s19, 1
        %p490 = scmp.lt.s32.totalorder %s487, 1
        %s491 = scalar_select %p490, %s487, 1
        %s492 = smul.addr %s491, 4
        %s493 = smul.addr %s489, 8
        %s494 = sadd.s32 %s492, %s493
        %s495 = smul.addr %s494, 8
        %s496 = scalar_lea.vmem %s2, %s495
      $region40: #{sa_layer_forward.1} parent=35 // pred_fallthru
        _
    $region36: #{sa_layer_forward.1} parent=5 // pred_fallthru
      _
  $region6: #{sa_layer_forward.1} parent=0 // loop_footer
    %s12 = sadd.s32 1, %s8
  $region7: #{sa_layer_forward.1} parent=0 // loop_footer_branch
    %7 = sbr.rel target = $region3
  $region8: #{sa_layer_forward.1} parent=0 // loop_exit
    _

</llo_original>
